<compile_context>
chip_gen: v6e
topology: v6e:2x2x1
jax: 0.10.0
libtpu: 0.0.40
codegen_flags: <defaults>
</compile_context>

<pallas_src>
import jax
import jax.numpy as jnp
from jax.experimental import pallas as pl
from jax.experimental.pallas import tpu as pltpu


# ----------------------------------------------------------------------------
# Wrapper-side constant builders (pure indexing / tiny fixed matrices)
# ----------------------------------------------------------------------------
def _bilinear_matrix(out_len, in_len):
    """Row r holds the 2-tap weights over the input axis for output index r
    (PyTorch Upsample(scale_factor=2, mode='bilinear', align_corners=False))."""
    d = jnp.arange(out_len, dtype=jnp.float32)
    src = jnp.maximum((d + 0.5) * (in_len / out_len) - 0.5, 0.0)
    lo = jnp.floor(src).astype(jnp.int32)
    hi = jnp.minimum(lo + 1, in_len - 1)
    t = src - lo.astype(jnp.float32)
    cols = jnp.arange(in_len)[None, :]
    m = ((cols == lo[:, None]) * (1.0 - t[:, None])
         + (cols == hi[:, None]) * t[:, None])
    return m.astype(jnp.float32)                          # (out_len, in_len)


def _conv_border_masks(Hc, Wc, stride):
    """mask[t, l] = 1 where tap t = ky*3+kx of a 3x3/pad=1 conv reads a real
    input element at flat output position l = ho*Wc + wo (0 -> zero padding)."""
    ho = jnp.arange(Hc)[:, None]
    wo = jnp.arange(Wc)[None, :]
    rows = []
    for ky in range(3):
        for kx in range(3):
            if stride == 1:
                ok = ((ho + ky - 1 >= 0) & (ho + ky - 1 < Hc)
                      & (wo + kx - 1 >= 0) & (wo + kx - 1 < Wc))
            else:  # stride-2 taps on polyphase planes: only top/left taps pad
                ok = (ho >= (1 if ky == 0 else 0)) & (wo >= (1 if kx == 0 else 0))
            rows.append(ok.reshape(Hc * Wc))
    return jnp.stack(rows).astype(jnp.float32)            # (9, Hc*Wc)


def _tap_shifts(Wc, L, stride):
    """Static lane-roll amounts so roll(slab, s)[:, l] == slab[:, l + d(tap)]."""
    shifts = []
    for ky in range(3):
        for kx in range(3):
            if stride == 1:
                d = (ky - 1) * Wc + (kx - 1)
            else:  # taps read same-resolution polyphase planes
                d = (-Wc if ky == 0 else 0) + (-1 if kx == 0 else 0)
            shifts.append((-d) % L)
    return shifts


# polyphase plane used by each tap of a stride-2 conv (planes = x[pr::2, pc::2])
_PLANE_OF_TAP = [((ky + 1) % 2) * 2 + ((kx + 1) % 2)
                 for ky in range(3) for kx in range(3)]


def _conv_weight_matrix(w_hwio):
    """(3,3,Cin,Cout) HWIO -> (Cout, 9*Cin) bf16; column = (ky*3+kx)*Cin + ci.
    (PyTorch OIHW checkpoints need w.transpose(2, 3, 1, 0) first.)"""
    kh, kw, cin, cout = w_hwio.shape
    return w_hwio.reshape(kh * kw * cin, cout).T.astype(jnp.bfloat16)


# ----------------------------------------------------------------------------
# Fused block kernel:
#   [bilinear x2]? -> PReLU -> Conv3x3(s in {1,2}) -> PReLU -> Conv3x3(1)
#   [+ residual add from ColumnBlock.forward]
# ----------------------------------------------------------------------------
def _make_fused_block_kernel(mode, cin, cout, shifts1, shifts2, has_residual):

    def kernel(*refs):
        it = iter(refs)
        alphas_ref = next(it)                         # SMEM (2,)
        x_ref = next(it)                              # (1,Cin,L) | (1,4,Cin,L1)
        m_ref = next(it) if mode == "up" else None    # (Lin, L1) upsample matrix
        mask1_ref = next(it)                          # (9, L1)
        mask2_ref = next(it)                          # (9, L1)
        w1_ref = next(it)                             # (Cout, 9*Cin)   bf16
        b1_ref = next(it)                             # (Cout, 1)       f32
        w2_ref = next(it)                             # (Cout, 9*Cout)  bf16
        b2_ref = next(it)                             # (Cout, 1)       f32
        res_ref = next(it) if has_residual else None  # (1, Cout, L1)
        o_ref = next(it)                              # (1, Cout, L1)
        p1_ref = next(it)                             # VMEM (9*Cin, L1)  scratch
        p2_ref = next(it)                             # VMEM (9*Cout, L1) scratch

        a1 = alphas_ref[0]
        a2 = alphas_ref[1]

        def prelu(v, a):                              # f32 compare/select
            return jnp.where(v >= 0, v, a * v)

        def conv3x3(srcs, src_of_tap, shifts, mask_ref, w_ref, b_ref, p_ref, c):
            # In-kernel im2col: each tap is an XLU lane roll of the (c, L)
            # slab; border masks stand in for the zero padding.  The (9c, L)
            # patch matrix is assembled in VMEM scratch and consumed by one
            # lane-dense MXU matmul against the resident (Cout, 9c) weight.
            for t in range(9):
                s = shifts[t]
                src = srcs[src_of_tap[t]]
                tap = pltpu.roll(src, s, axis=1) if s else src
                p_ref[t * c:(t + 1) * c, :] = tap * mask_ref[t:t + 1, :]
            patches = p_ref[...].astype(jnp.bfloat16)
            acc = jnp.dot(w_ref[...], patches, preferred_element_type=jnp.float32)
            return acc + b_ref[...]

        # -- stage 1: conv1 input slab(s); PReLU applied once per element -----
        if mode == "s2":
            srcs1 = [prelu(x_ref[0, p], a1) for p in range(4)]
            src_of_tap1 = _PLANE_OF_TAP
        elif mode == "up":
            # bilinear x2 fused as one matmul against a fixed (Lin, 4*Lin) matrix
            up = jnp.dot(x_ref[0], m_ref[...], preferred_element_type=jnp.float32)
            srcs1 = [prelu(up, a1)]
            src_of_tap1 = [0] * 9
        else:  # "s1"
            srcs1 = [prelu(x_ref[0], a1)]
            src_of_tap1 = [0] * 9

        h = conv3x3(srcs1, src_of_tap1, shifts1, mask1_ref, w1_ref, b1_ref,
                    p1_ref, cin)                      # (Cout, L1) f32

        # -- stage 2: second conv; intermediate never round-trips HBM ---------
        out = conv3x3([prelu(h, a2)], [0] * 9, shifts2, mask2_ref, w2_ref,
                      b2_ref, p2_ref, cout)           # (Cout, L1) f32

        if has_residual:
            out = out + res_ref[0]                    # ColumnBlock `out += ...`
        o_ref[0] = out.astype(o_ref.dtype)

    return kernel


def fused_two_conv_block(x, params, residual=None):
    """Run one fused block.  x / residual / return value are NCHW float32."""
    mode = params["mode"]
    N, cin, H, W = x.shape
    cout = params["cout"]

    if mode == "s2":
        Ho, Wo = H // 2, W // 2
    elif mode == "up":
        Ho, Wo = 2 * H, 2 * W
    else:
        Ho, Wo = H, W
    L1 = Ho * Wo

    inputs = [params["alphas"]]
    in_specs = [pl.BlockSpec(memory_space=pltpu.MemorySpace.SMEM)]

    if mode == "s2":
        # Polyphase (2x2 phase) split so the stride-2 im2col stays unit lane
        # rolls in-kernel.  Same total bytes as the input, done once by XLA.
        planes = jnp.stack(
            [x[:, :, pr::2, pc::2] for pr in (0, 1) for pc in (0, 1)],
            axis=1).reshape(N, 4, cin, L1)
        inputs.append(planes)
        in_specs.append(pl.BlockSpec((1, 4, cin, L1), lambda n: (n, 0, 0, 0)))
    else:
        inputs.append(x.reshape(N, cin, H * W))
        in_specs.append(pl.BlockSpec((1, cin, H * W), lambda n: (n, 0, 0)))
        if mode == "up":
            # bilinear x2 (align_corners=False) folded into one fixed matrix:
            # up_flat = x_flat @ kron(A^T, B^T), executed inside the kernel.
            A = _bilinear_matrix(2 * H, H)
            B = _bilinear_matrix(2 * W, W)
            M = jnp.kron(A.T, B.T)                         # (H*W, 4*H*W)
            inputs.append(M)
            in_specs.append(pl.BlockSpec((H * W, L1), lambda n: (0, 0)))

    mask1 = _conv_border_masks(Ho, Wo, 2 if mode == "s2" else 1)
    mask2 = _conv_border_masks(Ho, Wo, 1)
    inputs += [mask1, mask2, params["w1"], params["b1"], params["w2"], params["b2"]]
    in_specs += [pl.BlockSpec((9, L1), lambda n: (0, 0)),
                 pl.BlockSpec((9, L1), lambda n: (0, 0)),
                 pl.BlockSpec(params["w1"].shape, lambda n: (0, 0)),
                 pl.BlockSpec(params["b1"].shape, lambda n: (0, 0)),
                 pl.BlockSpec(params["w2"].shape, lambda n: (0, 0)),
                 pl.BlockSpec(params["b2"].shape, lambda n: (0, 0))]

    has_residual = residual is not None
    if has_residual:
        inputs.append(residual.reshape(N, cout, L1))
        in_specs.append(pl.BlockSpec((1, cout, L1), lambda n: (n, 0, 0)))

    kernel = _make_fused_block_kernel(
        mode, cin, cout,
        _tap_shifts(Wo, L1, 2 if mode == "s2" else 1),
        _tap_shifts(Wo, L1, 1),
        has_residual)

    # TODO(synk): for production CANF_VC resolutions, additionally tile the
    # flattened H*W axis (1-2K lanes per block) so double-buffered blocks stay
    # within v7x's 64 MiB VMEM; whole feature maps fit trivially at demo scale.
    out = pl.pallas_call(
        kernel,
        out_shape=jax.ShapeDtypeStruct((N, cout, L1), jnp.float32),
        grid=(N,),
        in_specs=in_specs,
        out_specs=pl.BlockSpec((1, cout, L1), lambda n: (n, 0, 0)),
        scratch_shapes=[pltpu.VMEM((9 * cin, L1), jnp.float32),
                        pltpu.VMEM((9 * cout, L1), jnp.float32)],
        compiler_params=pltpu.CompilerParams(
            dimension_semantics=("parallel",)),
    )(*inputs)
    return out.reshape(N, cout, Ho, Wo)


# ----------------------------------------------------------------------------
# Parameter construction (deterministic, synthetic) and ColumnBlock forward
# ----------------------------------------------------------------------------
def _init_block_params(key, cin, cout, mode):
    k1, k2, k3, k4 = jax.random.split(key, 4)
    w1 = jax.random.normal(k1, (3, 3, cin, cout), jnp.float32) * 0.1
    w2 = jax.random.normal(k2, (3, 3, cout, cout), jnp.float32) * 0.1
    b1 = jax.random.normal(k3, (cout,), jnp.float32) * 0.05
    b2 = jax.random.normal(k4, (cout,), jnp.float32) * 0.05
    return {
        "mode": mode, "cin": cin, "cout": cout,
        "alphas": jnp.full((2,), 0.25, jnp.float32),   # nn.PReLU() default init
        "w1": _conv_weight_matrix(w1), "b1": b1.reshape(cout, 1),
        "w2": _conv_weight_matrix(w2), "b2": b2.reshape(cout, 1),
    }


def init_column_block(key, channels, down):
    channels = list(channels)
    if not down:
        channels = channels[::-1]
    n_res = len(channels)
    keys = jax.random.split(key, n_res + len(channels) - 1)
    # ResidualBlock(c, c, stride=1): PReLU->Conv(c,c,1)->PReLU->Conv(c,c,1)
    res = [_init_block_params(keys[i], c, c, "s1") for i, c in enumerate(channels)]
    # Down: PReLU->Conv(cin,cout,2)->PReLU->Conv(cout,cout,1)
    # Up:   Upsample(x2)->PReLU->Conv(cin,cout,1)->PReLU->Conv(cout,cout,1)
    bridge_mode = "s2" if down else "up"
    bridge = [_init_block_params(keys[n_res + j], ci, co, bridge_mode)
              for j, (ci, co) in enumerate(zip(channels[:-1], channels[1:]))]
    return {"down": down, "res": res, "bridge": bridge}


def column_block_forward(params, inputs):
    """Faithful port of ColumnBlock.forward.  inputs: list of NCHW arrays."""
    down = params["down"]
    if not down:
        inputs = inputs[::-1]
    outputs = []
    for i, x in enumerate(inputs):
        res_out = fused_two_conv_block(x, params["res"][i])
        if i == 0:
            out = res_out
        else:
            # bridge(outputs[-1]) with the `out += ...` add fused in-kernel
            out = fused_two_conv_block(outputs[-1], params["bridge"][i - 1],
                                       residual=res_out)
        outputs.append(out)
    if not down:
        outputs = outputs[::-1]
    return outputs


# ----------------------------------------------------------------------------
# Demo
# ----------------------------------------------------------------------------
if __name__ == "__main__":
    key = jax.random.PRNGKey(0)
    k_in0, k_in1, k_down, k_up = jax.random.split(key, 4)

    channels = [4, 8]
    # NCHW inputs, like the PyTorch module: a 2-level feature pyramid.
    x0 = jax.random.normal(k_in0, (2, 4, 16, 16), jnp.float32)
    x1 = jax.random.normal(k_in1, (2, 8, 8, 8), jnp.float32)
    inputs = [x0, x1]

    params_down = init_column_block(k_down, channels, down=True)
    params_up = init_column_block(k_up, channels, down=False)

    outs_down = column_block_forward(params_down, inputs)
    outs_up = column_block_forward(params_up, inputs)
    for o in outs_down + outs_up:
        jax.block_until_ready(o)

    assert outs_down[0].shape == (2, 4, 16, 16)
    assert outs_down[1].shape == (2, 8, 8, 8)
    assert outs_up[0].shape == (2, 4, 16, 16)
    assert outs_up[1].shape == (2, 8, 8, 8)
    assert all(bool(jnp.all(jnp.isfinite(o))) for o in outs_down + outs_up)

    print("KERNEL_OK")
</pallas_src>

<mosaic_0001>
module attributes {stable_mosaic.version = 11 : i64} {
  func.func @kernel(%arg0: i32, %arg1: memref<2xf32, #tpu.memory_space<smem>>, %arg2: memref<1x4x256xf32, #tpu.memory_space<vmem>>, %arg3: memref<9x256xf32, #tpu.memory_space<vmem>>, %arg4: memref<9x256xf32, #tpu.memory_space<vmem>>, %arg5: memref<4x36xbf16, #tpu.memory_space<vmem>>, %arg6: memref<4x1xf32, #tpu.memory_space<vmem>>, %arg7: memref<4x36xbf16, #tpu.memory_space<vmem>>, %arg8: memref<4x1xf32, #tpu.memory_space<vmem>>, %arg9: memref<1x4x256xf32, #tpu.memory_space<vmem>>, %arg10: memref<36x256xf32, #tpu.memory_space<vmem>>, %arg11: memref<36x256xf32, #tpu.memory_space<vmem>>) attributes {dimension_semantics = [#tpu.dimension_semantics<parallel>], iteration_bounds = array<i64: 2>, scalar_prefetch = 0 : i64, scratch_operands = 2 : i64, tpu.core_type = #tpu.core_type<tc>, window_params = [{transform_indices = @transform_0, window_bounds = array<i64: 2>}, {transform_indices = @transform_1, window_bounds = array<i64: 1, 4, 256>}, {pipeline_mode = #tpu.pipeline_mode<synchronous>, transform_indices = @transform_2, window_bounds = array<i64: 9, 256>}, {pipeline_mode = #tpu.pipeline_mode<synchronous>, transform_indices = @transform_3, window_bounds = array<i64: 9, 256>}, {pipeline_mode = #tpu.pipeline_mode<synchronous>, transform_indices = @transform_4, window_bounds = array<i64: 4, 36>}, {pipeline_mode = #tpu.pipeline_mode<synchronous>, transform_indices = @transform_5, window_bounds = array<i64: 4, 1>}, {pipeline_mode = #tpu.pipeline_mode<synchronous>, transform_indices = @transform_6, window_bounds = array<i64: 4, 36>}, {pipeline_mode = #tpu.pipeline_mode<synchronous>, transform_indices = @transform_7, window_bounds = array<i64: 4, 1>}, {transform_indices = @transform_8, window_bounds = array<i64: 1, 4, 256>}]} {
    %c0 = arith.constant 0 : index
    %0 = memref.load %arg1[%c0] : memref<2xf32, #tpu.memory_space<smem>>
    %c1 = arith.constant 1 : index
    %1 = memref.load %arg1[%c1] : memref<2xf32, #tpu.memory_space<smem>>
    %c0_0 = arith.constant 0 : index
    %c0_1 = arith.constant 0 : index
    %c0_2 = arith.constant 0 : index
    %2 = vector.load %arg2[%c0_0, %c0_1, %c0_2] : memref<1x4x256xf32, #tpu.memory_space<vmem>>, vector<1x4x256xf32>
    %3 = vector.shape_cast %2 : vector<1x4x256xf32> to vector<4x256xf32>
    %cst = arith.constant 0.000000e+00 : f32
    %4 = vector.broadcast %cst : f32 to vector<4x256xf32>
    %5 = arith.cmpf oge, %3, %4 : vector<4x256xf32>
    %6 = vector.broadcast %0 : f32 to vector<4x256xf32>
    %7 = arith.mulf %6, %3 : vector<4x256xf32>
    %8 = arith.select %5, %3, %7 : vector<4x256xi1>, vector<4x256xf32>
    %c17_i32 = arith.constant 17 : i32
    %9 = tpu.dynamic_rotate %8 by %c17_i32 dim 1 : vector<4x256xf32>, i32 -> vector<4x256xf32>
    %c0_3 = arith.constant 0 : index
    %c0_4 = arith.constant 0 : index
    %10 = vector.load %arg3[%c0_3, %c0_4] : memref<9x256xf32, #tpu.memory_space<vmem>>, vector<1x256xf32>
    %11 = vector.broadcast %10 : vector<1x256xf32> to vector<4x256xf32>
    %12 = arith.mulf %9, %11 : vector<4x256xf32>
    %c0_5 = arith.constant 0 : index
    %c0_6 = arith.constant 0 : index
    %13 = vector.load %arg10[%c0_5, %c0_6] : memref<36x256xf32, #tpu.memory_space<vmem>>, vector<4x256xf32>
    tpu.vector_store %arg10[%c0_5, %c0_6], %12 {strides = array<i32>} : memref<36x256xf32, #tpu.memory_space<vmem>>, vector<4x256xf32>,
    %c16_i32 = arith.constant 16 : i32
    %14 = tpu.dynamic_rotate %8 by %c16_i32 dim 1 : vector<4x256xf32>, i32 -> vector<4x256xf32>
    %c1_7 = arith.constant 1 : index
    %c0_8 = arith.constant 0 : index
    %15 = vector.load %arg3[%c1_7, %c0_8] : memref<9x256xf32, #tpu.memory_space<vmem>>, vector<1x256xf32>
    %16 = vector.broadcast %15 : vector<1x256xf32> to vector<4x256xf32>
    %17 = arith.mulf %14, %16 : vector<4x256xf32>
    %c4 = arith.constant 4 : index
    %c0_9 = arith.constant 0 : index
    %18 = vector.load %arg10[%c4, %c0_9] : memref<36x256xf32, #tpu.memory_space<vmem>>, vector<4x256xf32>
    tpu.vector_store %arg10[%c4, %c0_9], %17 {strides = array<i32>} : memref<36x256xf32, #tpu.memory_space<vmem>>, vector<4x256xf32>,
    %c15_i32 = arith.constant 15 : i32
    %19 = tpu.dynamic_rotate %8 by %c15_i32 dim 1 : vector<4x256xf32>, i32 -> vector<4x256xf32>
    %c2 = arith.constant 2 : index
    %c0_10 = arith.constant 0 : index
    %20 = vector.load %arg3[%c2, %c0_10] : memref<9x256xf32, #tpu.memory_space<vmem>>, vector<1x256xf32>
    %21 = vector.broadcast %20 : vector<1x256xf32> to vector<4x256xf32>
    %22 = arith.mulf %19, %21 : vector<4x256xf32>
    %c8 = arith.constant 8 : index
    %c0_11 = arith.constant 0 : index
    %23 = vector.load %arg10[%c8, %c0_11] : memref<36x256xf32, #tpu.memory_space<vmem>>, vector<4x256xf32>
    tpu.vector_store %arg10[%c8, %c0_11], %22 {strides = array<i32>} : memref<36x256xf32, #tpu.memory_space<vmem>>, vector<4x256xf32>,
    %c1_i32 = arith.constant 1 : i32
    %24 = tpu.dynamic_rotate %8 by %c1_i32 dim 1 : vector<4x256xf32>, i32 -> vector<4x256xf32>
    %c3 = arith.constant 3 : index
    %c0_12 = arith.constant 0 : index
    %25 = vector.load %arg3[%c3, %c0_12] : memref<9x256xf32, #tpu.memory_space<vmem>>, vector<1x256xf32>
    %26 = vector.broadcast %25 : vector<1x256xf32> to vector<4x256xf32>
    %27 = arith.mulf %24, %26 : vector<4x256xf32>
    %c12 = arith.constant 12 : index
    %c0_13 = arith.constant 0 : index
    %28 = vector.load %arg10[%c12, %c0_13] : memref<36x256xf32, #tpu.memory_space<vmem>>, vector<4x256xf32>
    tpu.vector_store %arg10[%c12, %c0_13], %27 {strides = array<i32>} : memref<36x256xf32, #tpu.memory_space<vmem>>, vector<4x256xf32>,
    %c4_14 = arith.constant 4 : index
    %c0_15 = arith.constant 0 : index
    %29 = vector.load %arg3[%c4_14, %c0_15] : memref<9x256xf32, #tpu.memory_space<vmem>>, vector<1x256xf32>
    %30 = vector.broadcast %29 : vector<1x256xf32> to vector<4x256xf32>
    %31 = arith.mulf %8, %30 : vector<4x256xf32>
    %c16 = arith.constant 16 : index
    %c0_16 = arith.constant 0 : index
    %32 = vector.load %arg10[%c16, %c0_16] : memref<36x256xf32, #tpu.memory_space<vmem>>, vector<4x256xf32>
    tpu.vector_store %arg10[%c16, %c0_16], %31 {strides = array<i32>} : memref<36x256xf32, #tpu.memory_space<vmem>>, vector<4x256xf32>,
    %c255_i32 = arith.constant 255 : i32
    %33 = tpu.dynamic_rotate %8 by %c255_i32 dim 1 : vector<4x256xf32>, i32 -> vector<4x256xf32>
    %c5 = arith.constant 5 : index
    %c0_17 = arith.constant 0 : index
    %34 = vector.load %arg3[%c5, %c0_17] : memref<9x256xf32, #tpu.memory_space<vmem>>, vector<1x256xf32>
    %35 = vector.broadcast %34 : vector<1x256xf32> to vector<4x256xf32>
    %36 = arith.mulf %33, %35 : vector<4x256xf32>
    %c20 = arith.constant 20 : index
    %c0_18 = arith.constant 0 : index
    %37 = vector.load %arg10[%c20, %c0_18] : memref<36x256xf32, #tpu.memory_space<vmem>>, vector<4x256xf32>
    tpu.vector_store %arg10[%c20, %c0_18], %36 {strides = array<i32>} : memref<36x256xf32, #tpu.memory_space<vmem>>, vector<4x256xf32>,
    %c241_i32 = arith.constant 241 : i32
    %38 = tpu.dynamic_rotate %8 by %c241_i32 dim 1 : vector<4x256xf32>, i32 -> vector<4x256xf32>
    %c6 = arith.constant 6 : index
    %c0_19 = arith.constant 0 : index
    %39 = vector.load %arg3[%c6, %c0_19] : memref<9x256xf32, #tpu.memory_space<vmem>>, vector<1x256xf32>
    %40 = vector.broadcast %39 : vector<1x256xf32> to vector<4x256xf32>
    %41 = arith.mulf %38, %40 : vector<4x256xf32>
    %c24 = arith.constant 24 : index
    %c0_20 = arith.constant 0 : index
    %42 = vector.load %arg10[%c24, %c0_20] : memref<36x256xf32, #tpu.memory_space<vmem>>, vector<4x256xf32>
    tpu.vector_store %arg10[%c24, %c0_20], %41 {strides = array<i32>} : memref<36x256xf32, #tpu.memory_space<vmem>>, vector<4x256xf32>,
    %c240_i32 = arith.constant 240 : i32
    %43 = tpu.dynamic_rotate %8 by %c240_i32 dim 1 : vector<4x256xf32>, i32 -> vector<4x256xf32>
    %c7 = arith.constant 7 : index
    %c0_21 = arith.constant 0 : index
    %44 = vector.load %arg3[%c7, %c0_21] : memref<9x256xf32, #tpu.memory_space<vmem>>, vector<1x256xf32>
    %45 = vector.broadcast %44 : vector<1x256xf32> to vector<4x256xf32>
    %46 = arith.mulf %43, %45 : vector<4x256xf32>
    %c28 = arith.constant 28 : index
    %c0_22 = arith.constant 0 : index
    %47 = vector.load %arg10[%c28, %c0_22] : memref<36x256xf32, #tpu.memory_space<vmem>>, vector<4x256xf32>
    tpu.vector_store %arg10[%c28, %c0_22], %46 {strides = array<i32>} : memref<36x256xf32, #tpu.memory_space<vmem>>, vector<4x256xf32>,
    %c239_i32 = arith.constant 239 : i32
    %48 = tpu.dynamic_rotate %8 by %c239_i32 dim 1 : vector<4x256xf32>, i32 -> vector<4x256xf32>
    %c8_23 = arith.constant 8 : index
    %c0_24 = arith.constant 0 : index
    %49 = vector.load %arg3[%c8_23, %c0_24] : memref<9x256xf32, #tpu.memory_space<vmem>>, vector<1x256xf32>
    %50 = vector.broadcast %49 : vector<1x256xf32> to vector<4x256xf32>
    %51 = arith.mulf %48, %50 : vector<4x256xf32>
    %c32 = arith.constant 32 : index
    %c0_25 = arith.constant 0 : index
    %52 = vector.load %arg10[%c32, %c0_25] : memref<36x256xf32, #tpu.memory_space<vmem>>, vector<4x256xf32>
    tpu.vector_store %arg10[%c32, %c0_25], %51 {strides = array<i32>} : memref<36x256xf32, #tpu.memory_space<vmem>>, vector<4x256xf32>,
    %c0_26 = arith.constant 0 : index
    %c0_27 = arith.constant 0 : index
    %53 = vector.load %arg10[%c0_26, %c0_27] : memref<36x256xf32, #tpu.memory_space<vmem>>, vector<36x256xf32>
    %54 = arith.truncf %53 : vector<36x256xf32> to vector<36x256xbf16>
    %c0_28 = arith.constant 0 : index
    %c0_29 = arith.constant 0 : index
    %55 = vector.load %arg5[%c0_28, %c0_29] : memref<4x36xbf16, #tpu.memory_space<vmem>>, vector<4x36xbf16>
    %cst_30 = arith.constant dense<0.000000e+00> : vector<4x256xf32>
    %56 = tpu.matmul %55, %54, %cst_30 {dimension_numbers = #tpu.dot_dimension_numbers<[1], [0], [0], [1], [0, 0, 1, 1], [], []>} : vector<4x36xbf16>, vector<36x256xbf16>, vector<4x256xf32> -> vector<4x256xf32>
    %c0_31 = arith.constant 0 : index
    %c0_32 = arith.constant 0 : index
    %57 = vector.load %arg6[%c0_31, %c0_32] : memref<4x1xf32, #tpu.memory_space<vmem>>, vector<4x1xf32>
    %58 = vector.broadcast %57 : vector<4x1xf32> to vector<4x256xf32>
    %59 = arith.addf %56, %58 : vector<4x256xf32>
    %cst_33 = arith.constant 0.000000e+00 : f32
    %60 = vector.broadcast %cst_33 : f32 to vector<4x256xf32>
    %61 = arith.cmpf oge, %59, %60 : vector<4x256xf32>
    %62 = vector.broadcast %1 : f32 to vector<4x256xf32>
    %63 = arith.mulf %62, %59 : vector<4x256xf32>
    %64 = arith.select %61, %59, %63 : vector<4x256xi1>, vector<4x256xf32>
    %c17_i32_34 = arith.constant 17 : i32
    %65 = tpu.dynamic_rotate %64 by %c17_i32_34 dim 1 : vector<4x256xf32>, i32 -> vector<4x256xf32>
    %c0_35 = arith.constant 0 : index
    %c0_36 = arith.constant 0 : index
    %66 = vector.load %arg4[%c0_35, %c0_36] : memref<9x256xf32, #tpu.memory_space<vmem>>, vector<1x256xf32>
    %67 = vector.broadcast %66 : vector<1x256xf32> to vector<4x256xf32>
    %68 = arith.mulf %65, %67 : vector<4x256xf32>
    %c0_37 = arith.constant 0 : index
    %c0_38 = arith.constant 0 : index
    %69 = vector.load %arg11[%c0_37, %c0_38] : memref<36x256xf32, #tpu.memory_space<vmem>>, vector<4x256xf32>
    tpu.vector_store %arg11[%c0_37, %c0_38], %68 {strides = array<i32>} : memref<36x256xf32, #tpu.memory_space<vmem>>, vector<4x256xf32>,
    %c16_i32_39 = arith.constant 16 : i32
    %70 = tpu.dynamic_rotate %64 by %c16_i32_39 dim 1 : vector<4x256xf32>, i32 -> vector<4x256xf32>
    %c1_40 = arith.constant 1 : index
    %c0_41 = arith.constant 0 : index
    %71 = vector.load %arg4[%c1_40, %c0_41] : memref<9x256xf32, #tpu.memory_space<vmem>>, vector<1x256xf32>
    %72 = vector.broadcast %71 : vector<1x256xf32> to vector<4x256xf32>
    %73 = arith.mulf %70, %72 : vector<4x256xf32>
    %c4_42 = arith.constant 4 : index
    %c0_43 = arith.constant 0 : index
    %74 = vector.load %arg11[%c4_42, %c0_43] : memref<36x256xf32, #tpu.memory_space<vmem>>, vector<4x256xf32>
    tpu.vector_store %arg11[%c4_42, %c0_43], %73 {strides = array<i32>} : memref<36x256xf32, #tpu.memory_space<vmem>>, vector<4x256xf32>,
    %c15_i32_44 = arith.constant 15 : i32
    %75 = tpu.dynamic_rotate %64 by %c15_i32_44 dim 1 : vector<4x256xf32>, i32 -> vector<4x256xf32>
    %c2_45 = arith.constant 2 : index
    %c0_46 = arith.constant 0 : index
    %76 = vector.load %arg4[%c2_45, %c0_46] : memref<9x256xf32, #tpu.memory_space<vmem>>, vector<1x256xf32>
    %77 = vector.broadcast %76 : vector<1x256xf32> to vector<4x256xf32>
    %78 = arith.mulf %75, %77 : vector<4x256xf32>
    %c8_47 = arith.constant 8 : index
    %c0_48 = arith.constant 0 : index
    %79 = vector.load %arg11[%c8_47, %c0_48] : memref<36x256xf32, #tpu.memory_space<vmem>>, vector<4x256xf32>
    tpu.vector_store %arg11[%c8_47, %c0_48], %78 {strides = array<i32>} : memref<36x256xf32, #tpu.memory_space<vmem>>, vector<4x256xf32>,
    %c1_i32_49 = arith.constant 1 : i32
    %80 = tpu.dynamic_rotate %64 by %c1_i32_49 dim 1 : vector<4x256xf32>, i32 -> vector<4x256xf32>
    %c3_50 = arith.constant 3 : index
    %c0_51 = arith.constant 0 : index
    %81 = vector.load %arg4[%c3_50, %c0_51] : memref<9x256xf32, #tpu.memory_space<vmem>>, vector<1x256xf32>
    %82 = vector.broadcast %81 : vector<1x256xf32> to vector<4x256xf32>
    %83 = arith.mulf %80, %82 : vector<4x256xf32>
    %c12_52 = arith.constant 12 : index
    %c0_53 = arith.constant 0 : index
    %84 = vector.load %arg11[%c12_52, %c0_53] : memref<36x256xf32, #tpu.memory_space<vmem>>, vector<4x256xf32>
    tpu.vector_store %arg11[%c12_52, %c0_53], %83 {strides = array<i32>} : memref<36x256xf32, #tpu.memory_space<vmem>>, vector<4x256xf32>,
    %c4_54 = arith.constant 4 : index
    %c0_55 = arith.constant 0 : index
    %85 = vector.load %arg4[%c4_54, %c0_55] : memref<9x256xf32, #tpu.memory_space<vmem>>, vector<1x256xf32>
    %86 = vector.broadcast %85 : vector<1x256xf32> to vector<4x256xf32>
    %87 = arith.mulf %64, %86 : vector<4x256xf32>
    %c16_56 = arith.constant 16 : index
    %c0_57 = arith.constant 0 : index
    %88 = vector.load %arg11[%c16_56, %c0_57] : memref<36x256xf32, #tpu.memory_space<vmem>>, vector<4x256xf32>
    tpu.vector_store %arg11[%c16_56, %c0_57], %87 {strides = array<i32>} : memref<36x256xf32, #tpu.memory_space<vmem>>, vector<4x256xf32>,
    %c255_i32_58 = arith.constant 255 : i32
    %89 = tpu.dynamic_rotate %64 by %c255_i32_58 dim 1 : vector<4x256xf32>, i32 -> vector<4x256xf32>
    %c5_59 = arith.constant 5 : index
    %c0_60 = arith.constant 0 : index
    %90 = vector.load %arg4[%c5_59, %c0_60] : memref<9x256xf32, #tpu.memory_space<vmem>>, vector<1x256xf32>
    %91 = vector.broadcast %90 : vector<1x256xf32> to vector<4x256xf32>
    %92 = arith.mulf %89, %91 : vector<4x256xf32>
    %c20_61 = arith.constant 20 : index
    %c0_62 = arith.constant 0 : index
    %93 = vector.load %arg11[%c20_61, %c0_62] : memref<36x256xf32, #tpu.memory_space<vmem>>, vector<4x256xf32>
    tpu.vector_store %arg11[%c20_61, %c0_62], %92 {strides = array<i32>} : memref<36x256xf32, #tpu.memory_space<vmem>>, vector<4x256xf32>,
    %c241_i32_63 = arith.constant 241 : i32
    %94 = tpu.dynamic_rotate %64 by %c241_i32_63 dim 1 : vector<4x256xf32>, i32 -> vector<4x256xf32>
    %c6_64 = arith.constant 6 : index
    %c0_65 = arith.constant 0 : index
    %95 = vector.load %arg4[%c6_64, %c0_65] : memref<9x256xf32, #tpu.memory_space<vmem>>, vector<1x256xf32>
    %96 = vector.broadcast %95 : vector<1x256xf32> to vector<4x256xf32>
    %97 = arith.mulf %94, %96 : vector<4x256xf32>
    %c24_66 = arith.constant 24 : index
    %c0_67 = arith.constant 0 : index
    %98 = vector.load %arg11[%c24_66, %c0_67] : memref<36x256xf32, #tpu.memory_space<vmem>>, vector<4x256xf32>
    tpu.vector_store %arg11[%c24_66, %c0_67], %97 {strides = array<i32>} : memref<36x256xf32, #tpu.memory_space<vmem>>, vector<4x256xf32>,
    %c240_i32_68 = arith.constant 240 : i32
    %99 = tpu.dynamic_rotate %64 by %c240_i32_68 dim 1 : vector<4x256xf32>, i32 -> vector<4x256xf32>
    %c7_69 = arith.constant 7 : index
    %c0_70 = arith.constant 0 : index
    %100 = vector.load %arg4[%c7_69, %c0_70] : memref<9x256xf32, #tpu.memory_space<vmem>>, vector<1x256xf32>
    %101 = vector.broadcast %100 : vector<1x256xf32> to vector<4x256xf32>
    %102 = arith.mulf %99, %101 : vector<4x256xf32>
    %c28_71 = arith.constant 28 : index
    %c0_72 = arith.constant 0 : index
    %103 = vector.load %arg11[%c28_71, %c0_72] : memref<36x256xf32, #tpu.memory_space<vmem>>, vector<4x256xf32>
    tpu.vector_store %arg11[%c28_71, %c0_72], %102 {strides = array<i32>} : memref<36x256xf32, #tpu.memory_space<vmem>>, vector<4x256xf32>,
    %c239_i32_73 = arith.constant 239 : i32
    %104 = tpu.dynamic_rotate %64 by %c239_i32_73 dim 1 : vector<4x256xf32>, i32 -> vector<4x256xf32>
    %c8_74 = arith.constant 8 : index
    %c0_75 = arith.constant 0 : index
    %105 = vector.load %arg4[%c8_74, %c0_75] : memref<9x256xf32, #tpu.memory_space<vmem>>, vector<1x256xf32>
    %106 = vector.broadcast %105 : vector<1x256xf32> to vector<4x256xf32>
    %107 = arith.mulf %104, %106 : vector<4x256xf32>
    %c32_76 = arith.constant 32 : index
    %c0_77 = arith.constant 0 : index
    %108 = vector.load %arg11[%c32_76, %c0_77] : memref<36x256xf32, #tpu.memory_space<vmem>>, vector<4x256xf32>
    tpu.vector_store %arg11[%c32_76, %c0_77], %107 {strides = array<i32>} : memref<36x256xf32, #tpu.memory_space<vmem>>, vector<4x256xf32>,
    %c0_78 = arith.constant 0 : index
    %c0_79 = arith.constant 0 : index
    %109 = vector.load %arg11[%c0_78, %c0_79] : memref<36x256xf32, #tpu.memory_space<vmem>>, vector<36x256xf32>
    %110 = arith.truncf %109 : vector<36x256xf32> to vector<36x256xbf16>
    %c0_80 = arith.constant 0 : index
    %c0_81 = arith.constant 0 : index
    %111 = vector.load %arg7[%c0_80, %c0_81] : memref<4x36xbf16, #tpu.memory_space<vmem>>, vector<4x36xbf16>
    %cst_82 = arith.constant dense<0.000000e+00> : vector<4x256xf32>
    %112 = tpu.matmul %111, %110, %cst_82 {dimension_numbers = #tpu.dot_dimension_numbers<[1], [0], [0], [1], [0, 0, 1, 1], [], []>} : vector<4x36xbf16>, vector<36x256xbf16>, vector<4x256xf32> -> vector<4x256xf32>
    %c0_83 = arith.constant 0 : index
    %c0_84 = arith.constant 0 : index
    %113 = vector.load %arg8[%c0_83, %c0_84] : memref<4x1xf32, #tpu.memory_space<vmem>>, vector<4x1xf32>
    %114 = vector.broadcast %113 : vector<4x1xf32> to vector<4x256xf32>
    %115 = arith.addf %112, %114 : vector<4x256xf32>
    %c0_85 = arith.constant 0 : index
    %c0_86 = arith.constant 0 : index
    %c0_87 = arith.constant 0 : index
    %116 = vector.load %arg9[%c0_85, %c0_86, %c0_87] : memref<1x4x256xf32, #tpu.memory_space<vmem>>, vector<1x4x256xf32>
    %117 = vector.shape_cast %116 : vector<1x4x256xf32> to vector<4x256xf32>
    %118 = vector.shape_cast %115 : vector<4x256xf32> to vector<1x4x256xf32>
    tpu.vector_store %arg9[%c0_85, %c0_86, %c0_87], %118 {strides = array<i32>} : memref<1x4x256xf32, #tpu.memory_space<vmem>>, vector<1x4x256xf32>,
    return
  }
  func.func @transform_0(%arg0: i32) -> i32 {
    %c0_i32 = arith.constant 0 : i32
    %c0_i32_0 = arith.constant 0 : i32
    return %c0_i32 : i32
  }
  func.func @transform_1(%arg0: i32) -> (i32, i32, i32) {
    %c0_i32 = arith.constant 0 : i32
    %c0_i32_0 = arith.constant 0 : i32
    %c0_i32_1 = arith.constant 0 : i32
    return %arg0, %c0_i32, %c0_i32_0 : i32, i32, i32
  }
  func.func @transform_2(%arg0: i32) -> (i32, i32) {
    %c0_i32 = arith.constant 0 : i32
    %c0_i32_0 = arith.constant 0 : i32
    %c0_i32_1 = arith.constant 0 : i32
    return %c0_i32, %c0_i32_0 : i32, i32
  }
  func.func @transform_3(%arg0: i32) -> (i32, i32) {
    %c0_i32 = arith.constant 0 : i32
    %c0_i32_0 = arith.constant 0 : i32
    %c0_i32_1 = arith.constant 0 : i32
    return %c0_i32, %c0_i32_0 : i32, i32
  }
  func.func @transform_4(%arg0: i32) -> (i32, i32) {
    %c0_i32 = arith.constant 0 : i32
    %c0_i32_0 = arith.constant 0 : i32
    %c0_i32_1 = arith.constant 0 : i32
    return %c0_i32, %c0_i32_0 : i32, i32
  }
  func.func @transform_5(%arg0: i32) -> (i32, i32) {
    %c0_i32 = arith.constant 0 : i32
    %c0_i32_0 = arith.constant 0 : i32
    %c0_i32_1 = arith.constant 0 : i32
    return %c0_i32, %c0_i32_0 : i32, i32
  }
  func.func @transform_6(%arg0: i32) -> (i32, i32) {
    %c0_i32 = arith.constant 0 : i32
    %c0_i32_0 = arith.constant 0 : i32
    %c0_i32_1 = arith.constant 0 : i32
    return %c0_i32, %c0_i32_0 : i32, i32
  }
  func.func @transform_7(%arg0: i32) -> (i32, i32) {
    %c0_i32 = arith.constant 0 : i32
    %c0_i32_0 = arith.constant 0 : i32
    %c0_i32_1 = arith.constant 0 : i32
    return %c0_i32, %c0_i32_0 : i32, i32
  }
  func.func @transform_8(%arg0: i32) -> (i32, i32, i32) {
    %c0_i32 = arith.constant 0 : i32
    %c0_i32_0 = arith.constant 0 : i32
    %c0_i32_1 = arith.constant 0 : i32
    return %arg0, %c0_i32, %c0_i32_0 : i32, i32, i32
  }
}

</mosaic_0001>

<llo_original>
// kernel: tpu_custom_call.1
$region0: #{tpu_custom_call.1}
  #allocation0 [shape = 'u32[]', space=smem, size = 0x4, offset = 0x4, fixed_abs, tag = 'smem constant byte address 0x4 - core index']
  #allocation1 [shape = 'u32[144,128]{1,0:T(1,128)}', space=vmem, size = 0x12000, scoped, tag = 'internal scratch']
  #allocation2 [shape = 'f32[36,256]{1,0:T(8,128)}', space=vmem, size = 0xa000, scoped, tag = 'scratch operand']
  #allocation3 [shape = 'f32[36,256]{1,0:T(8,128)}', space=vmem, size = 0xa000, scoped, tag = 'scratch operand']
  %s0 = inlined_call_operand.vmem [shape: f32[2], index: 0, kind: input, shape index: {}]
  %s1 = inlined_call_operand.hbm [shape: f32[2,4,256], index: 1, kind: input, shape index: {}]
  %s2 = inlined_call_operand.hbm [shape: f32[9,256], index: 2, kind: input, shape index: {}]
  %s3 = inlined_call_operand.hbm [shape: f32[9,256], index: 3, kind: input, shape index: {}]
  %s4 = inlined_call_operand.vmem [shape: bf16[4,36], index: 4, kind: input, shape index: {}]
  %s5 = inlined_call_operand.vmem [shape: f32[4,1], index: 5, kind: input, shape index: {}]
  %s6 = inlined_call_operand.vmem [shape: bf16[4,36], index: 6, kind: input, shape index: {}]
  %s7 = inlined_call_operand.vmem [shape: f32[4,1], index: 7, kind: input, shape index: {}]
  %s8 = inlined_call_operand.hbm [shape: f32[2,4,256], index: 8, kind: output, shape index: {}]
  %s9 = sld [smem:[#allocation0]]
  $region81: #{tpu_custom_call.1} parent=0
    _
  %s11 = ssub.s32 1, %s9
  %s12 = scalar_select 0, %s11, %s9
  $region1: #{tpu_custom_call.1} parent=0
    #allocation4 [shape = 'u8[512]{0}', space=smem, size = 0x200, scoped, tag = 'input window, operand 0, single buffered']
    #allocation5 [shape = 's32[2]{0}', space=sflag, size = 0x8, scoped, tag = 'scoped memory for tpu_custom_call.1']
    #allocation6 [shape = 's32[2]{0}', space=sflag, size = 0x8, scoped, tag = 'scoped memory for tpu_custom_call.1']
    #allocation7 [shape = 's32[2]{0}', space=sflag, size = 0x8, scoped, tag = 'scoped memory for tpu_custom_call.1']
    #allocation8 [shape = 'u8[8192]{0}', space=vmem, size = 0x2000, scoped, tag = 'input window, operand 1']
    #allocation9 [shape = 'u8[16384]{0}', space=vmem, size = 0x4000, scoped, tag = 'input window, operand 2, single buffered']
    #allocation10 [shape = 's32[1]{0}', space=sflag, size = 0x4, scoped, tag = 'scoped memory for tpu_custom_call.1']
    #allocation11 [shape = 'u8[16384]{0}', space=vmem, size = 0x4000, scoped, tag = 'input window, operand 3, single buffered']
    #allocation12 [shape = 'u8[8192]{0}', space=vmem, size = 0x2000, scoped, tag = 'output window, operand 0']
    %13 = vsyncpa [#allocation7], 0
    %14 = vsyncpa [#allocation5], 0
    %s15 = scalar_lea.sflag [#allocation5], 1
    %16 = vsyncpa %s15, 0
    %17 = vsyncpa [#allocation10], 0
    %18 = vsyncpa [#allocation6], 0
    %s19 = scalar_lea.sflag [#allocation6], 1
    %20 = vsyncpa %s19, 0
    loop: start=0, step=1, limit=4
    $region2: #{tpu_custom_call.1} parent=1 // loop_pre_header
      _
    $region3: #{tpu_custom_call.1} parent=1 // loop_header
      %s22 = sphi 0, %s26
      %p23 = scmp.ge.s32.totalorder %s22, 4
      %s30 = sphi 0, %s30
      %s32 = sphi 0, %s30
      %s33 = sphi 0, %s32
      %s47 = sphi 0, %s33
      %s53 = sphi 0, %s55
      %s56 = sphi 0, %s53
      %s57 = sphi 0, %s56
      %s73 = sphi 0, %s57
      %s77 = sphi 0, %s77
      %s79 = sphi 0, %s77
      %s80 = sphi 0, %s79
      %s94 = sphi 0, %s80
      %s98 = sphi 0, %s98
      %s100 = sphi 0, %s98
      %s101 = sphi 0, %s100
      %s115 = sphi 0, %s101
      %s119 = sphi 0, %s119
      %s121 = sphi 0, %s119
      %s122 = sphi 0, %s121
      %s136 = sphi 0, %s122
      %s140 = sphi 0, %s140
      %s142 = sphi 0, %s140
      %s143 = sphi 0, %s142
      %s157 = sphi 0, %s143
      %s161 = sphi 0, %s161
      %s163 = sphi 0, %s161
      %s164 = sphi 0, %s163
      %s178 = sphi 0, %s164
      %s182 = sphi 0, %s182
      %s184 = sphi 0, %s182
      %s185 = sphi 0, %s184
      %s199 = sphi 0, %s185
      %s205 = sphi 0, %s207
      %s208 = sphi 0, %s205
      %s209 = sphi 0, %s208
      %s225 = sphi 0, %s209
    $region4: #{tpu_custom_call.1} parent=1 // loop_header_branch
      %25 = sbr.rel (%p23) target = $region8
    $region5: #{tpu_custom_call.1} parent=1 // loop_body
      %s27 = ssub.s32 %s22, 1
      %s28 = ssub.s32 %s22, 2
      %s29 = sadd.s32 %s22, 1
      %s31 = sadd.s32 %s30, 1
      %p34 = scmp.eq.s32.totalorder %s22, 1
      %p35 = scmp.ne.s32.totalorder %s30, %s32
      %p36 = scmp.eq.s32.totalorder %s22, 0
      %p37 = por %p35, %p36
      %p38 = scmp.ne.s32.totalorder %s30, %s32
      %p39 = scmp.eq.s32.totalorder %s27, 1
      %p40 = por %p38, %p39
      %p41 = scmp.ne.s32.totalorder %s32, %s33
      %p42 = scmp.eq.s32.totalorder %s27, 0
      %p43 = por %p41, %p42
      %p44 = scmp.ne.s32.totalorder %s32, %s33
      %p45 = scmp.eq.s32.totalorder %s28, 1
      %p46 = por %p44, %p45
      %p48 = scmp.ne.s32.totalorder %s33, %s47
      %p49 = scmp.eq.s32.totalorder %s28, 0
      %p50 = por %p48, %p49
      %s51 = ssub.s32 %s22, %s29
      %p52 = scmp.eq.s32.totalorder %s51, 0
      %s54 = sadd.s32 %s53, 1
      %s55 = scalar_select %p52, %s53, %s54
      %p58 = pneg %p52
      %p59 = scmp.eq.s32.totalorder %s22, 1
      %p60 = por %p58, %p59
      %p61 = scmp.ne.s32.totalorder %s53, %s56
      %p62 = scmp.eq.s32.totalorder %s22, 0
      %p63 = por %p61, %p62
      %p64 = scmp.ne.s32.totalorder %s53, %s56
      %p65 = scmp.eq.s32.totalorder %s27, 1
      %p66 = por %p64, %p65
      %p67 = scmp.ne.s32.totalorder %s56, %s57
      %p68 = scmp.eq.s32.totalorder %s27, 0
      %p69 = por %p67, %p68
      %p70 = scmp.ne.s32.totalorder %s56, %s57
      %p71 = scmp.eq.s32.totalorder %s28, 1
      %p72 = por %p70, %p71
      %p74 = scmp.ne.s32.totalorder %s57, %s73
      %p75 = scmp.eq.s32.totalorder %s28, 0
      %p76 = por %p74, %p75
      %s78 = sadd.s32 %s77, 1
      %p81 = scmp.eq.s32.totalorder %s22, 1
      %p82 = scmp.ne.s32.totalorder %s77, %s79
      %p83 = scmp.eq.s32.totalorder %s22, 0
      %p84 = por %p82, %p83
      %p85 = scmp.ne.s32.totalorder %s77, %s79
      %p86 = scmp.eq.s32.totalorder %s27, 1
      %p87 = por %p85, %p86
      %p88 = scmp.ne.s32.totalorder %s79, %s80
      %p89 = scmp.eq.s32.totalorder %s27, 0
      %p90 = por %p88, %p89
      %p91 = scmp.ne.s32.totalorder %s79, %s80
      %p92 = scmp.eq.s32.totalorder %s28, 1
      %p93 = por %p91, %p92
      %p95 = scmp.ne.s32.totalorder %s80, %s94
      %p96 = scmp.eq.s32.totalorder %s28, 0
      %p97 = por %p95, %p96
      %s99 = sadd.s32 %s98, 1
      %p102 = scmp.eq.s32.totalorder %s22, 1
      %p103 = scmp.ne.s32.totalorder %s98, %s100
      %p104 = scmp.eq.s32.totalorder %s22, 0
      %p105 = por %p103, %p104
      %p106 = scmp.ne.s32.totalorder %s98, %s100
      %p107 = scmp.eq.s32.totalorder %s27, 1
      %p108 = por %p106, %p107
      %p109 = scmp.ne.s32.totalorder %s100, %s101
      %p110 = scmp.eq.s32.totalorder %s27, 0
      %p111 = por %p109, %p110
      %p112 = scmp.ne.s32.totalorder %s100, %s101
      %p113 = scmp.eq.s32.totalorder %s28, 1
      %p114 = por %p112, %p113
      %p116 = scmp.ne.s32.totalorder %s101, %s115
      %p117 = scmp.eq.s32.totalorder %s28, 0
      %p118 = por %p116, %p117
      %s120 = sadd.s32 %s119, 1
      %p123 = scmp.eq.s32.totalorder %s22, 1
      %p124 = scmp.ne.s32.totalorder %s119, %s121
      %p125 = scmp.eq.s32.totalorder %s22, 0
      %p126 = por %p124, %p125
      %p127 = scmp.ne.s32.totalorder %s119, %s121
      %p128 = scmp.eq.s32.totalorder %s27, 1
      %p129 = por %p127, %p128
      %p130 = scmp.ne.s32.totalorder %s121, %s122
      %p131 = scmp.eq.s32.totalorder %s27, 0
      %p132 = por %p130, %p131
      %p133 = scmp.ne.s32.totalorder %s121, %s122
      %p134 = scmp.eq.s32.totalorder %s28, 1
      %p135 = por %p133, %p134
      %p137 = scmp.ne.s32.totalorder %s122, %s136
      %p138 = scmp.eq.s32.totalorder %s28, 0
      %p139 = por %p137, %p138
      %s141 = sadd.s32 %s140, 1
      %p144 = scmp.eq.s32.totalorder %s22, 1
      %p145 = scmp.ne.s32.totalorder %s140, %s142
      %p146 = scmp.eq.s32.totalorder %s22, 0
      %p147 = por %p145, %p146
      %p148 = scmp.ne.s32.totalorder %s140, %s142
      %p149 = scmp.eq.s32.totalorder %s27, 1
      %p150 = por %p148, %p149
      %p151 = scmp.ne.s32.totalorder %s142, %s143
      %p152 = scmp.eq.s32.totalorder %s27, 0
      %p153 = por %p151, %p152
      %p154 = scmp.ne.s32.totalorder %s142, %s143
      %p155 = scmp.eq.s32.totalorder %s28, 1
      %p156 = por %p154, %p155
      %p158 = scmp.ne.s32.totalorder %s143, %s157
      %p159 = scmp.eq.s32.totalorder %s28, 0
      %p160 = por %p158, %p159
      %s162 = sadd.s32 %s161, 1
      %p165 = scmp.eq.s32.totalorder %s22, 1
      %p166 = scmp.ne.s32.totalorder %s161, %s163
      %p167 = scmp.eq.s32.totalorder %s22, 0
      %p168 = por %p166, %p167
      %p169 = scmp.ne.s32.totalorder %s161, %s163
      %p170 = scmp.eq.s32.totalorder %s27, 1
      %p171 = por %p169, %p170
      %p172 = scmp.ne.s32.totalorder %s163, %s164
      %p173 = scmp.eq.s32.totalorder %s27, 0
      %p174 = por %p172, %p173
      %p175 = scmp.ne.s32.totalorder %s163, %s164
      %p176 = scmp.eq.s32.totalorder %s28, 1
      %p177 = por %p175, %p176
      %p179 = scmp.ne.s32.totalorder %s164, %s178
      %p180 = scmp.eq.s32.totalorder %s28, 0
      %p181 = por %p179, %p180
      %s183 = sadd.s32 %s182, 1
      %p186 = scmp.eq.s32.totalorder %s22, 1
      %p187 = scmp.ne.s32.totalorder %s182, %s184
      %p188 = scmp.eq.s32.totalorder %s22, 0
      %p189 = por %p187, %p188
      %p190 = scmp.ne.s32.totalorder %s182, %s184
      %p191 = scmp.eq.s32.totalorder %s27, 1
      %p192 = por %p190, %p191
      %p193 = scmp.ne.s32.totalorder %s184, %s185
      %p194 = scmp.eq.s32.totalorder %s27, 0
      %p195 = por %p193, %p194
      %p196 = scmp.ne.s32.totalorder %s184, %s185
      %p197 = scmp.eq.s32.totalorder %s28, 1
      %p198 = por %p196, %p197
      %p200 = scmp.ne.s32.totalorder %s185, %s199
      %p201 = scmp.eq.s32.totalorder %s28, 0
      %p202 = por %p200, %p201
      %s203 = ssub.s32 %s22, %s29
      %p204 = scmp.eq.s32.totalorder %s203, 0
      %s206 = sadd.s32 %s205, 1
      %s207 = scalar_select %p204, %s205, %s206
      %p210 = pneg %p204
      %p211 = scmp.eq.s32.totalorder %s22, 1
      %p212 = por %p210, %p211
      %p213 = scmp.ne.s32.totalorder %s205, %s208
      %p214 = scmp.eq.s32.totalorder %s22, 0
      %p215 = por %p213, %p214
      %p216 = scmp.ne.s32.totalorder %s205, %s208
      %p217 = scmp.eq.s32.totalorder %s27, 1
      %p218 = por %p216, %p217
      %p219 = scmp.ne.s32.totalorder %s208, %s209
      %p220 = scmp.eq.s32.totalorder %s27, 0
      %p221 = por %p219, %p220
      %p222 = scmp.ne.s32.totalorder %s208, %s209
      %p223 = scmp.eq.s32.totalorder %s28, 1
      %p224 = por %p222, %p223
      %p226 = scmp.ne.s32.totalorder %s209, %s225
      %p227 = scmp.eq.s32.totalorder %s28, 0
      %p228 = por %p226, %p227
      %p229 = scmp.le.s32.totalorder 1, %s22
      %p230 = scmp.lt.s32.totalorder %s22, 3
      %p231 = pnand %p229, %p230
      %p232 = pneg %p231
      // Predicated region
      $region9: #{tpu_custom_call.1} parent=5 // pred_check
        _
      $region10: #{tpu_custom_call.1} parent=5 // pred_check_branch
        %234 = sbr.rel (%p231) target = $region12
      $region11: #{tpu_custom_call.1} parent=5 // pred_region
        %s235 = ssub.s32 %s22, 1
        // Predicated region
        $region13: #{tpu_custom_call.1} parent=11 // pred_check
          %p236 = pneg %p43
        $region14: #{tpu_custom_call.1} parent=11 // pred_check_branch
          %238 = sbr.rel (%p236) target = $region16
        $region15: #{tpu_custom_call.1} parent=11 // pred_region
          %s240 = ssub.s32 16, 16
          %241 = vsyncadd [#allocation7], %s240
          %s243 = sshll.u32 %s0, 4
          %s244 = int_to_ptr.vmem [resolvable:$true] %s243
          %246 = dma.vmem_to_smem %s244, 16, [#allocation4], [#allocation7]
        $region16: #{tpu_custom_call.1} parent=11 // pred_fallthru
          _
        // Predicated region
        $region17: #{tpu_custom_call.1} parent=11 // pred_check
          %p247 = pneg %p90
        $region18: #{tpu_custom_call.1} parent=11 // pred_check_branch
          %249 = sbr.rel (%p247) target = $region20
        $region19: #{tpu_custom_call.1} parent=11 // pred_region
          %s251 = ssub.s32 512, 512
          %252 = vsyncadd [#allocation10], %s251
          %s253 = sshll.u32 [#allocation9], 4
          %s254 = int_to_ptr.vmem [resolvable:$true] %s253
          %259 = dma.hbm_to_vmem [thread:$0]  %s2, 512, %s254, [#allocation10], 256, 256, 16
        $region20: #{tpu_custom_call.1} parent=11 // pred_fallthru
          _
        // Predicated region
        $region21: #{tpu_custom_call.1} parent=11 // pred_check
          %p260 = pneg %p111
        $region22: #{tpu_custom_call.1} parent=11 // pred_check_branch
          %262 = sbr.rel (%p260) target = $region24
        $region23: #{tpu_custom_call.1} parent=11 // pred_region
          %s264 = ssub.s32 512, 512
          %265 = vsyncadd [#allocation10], %s264
          %s266 = sshll.u32 [#allocation11], 4
          %s267 = int_to_ptr.vmem [resolvable:$true] %s266
          %272 = dma.hbm_to_vmem [thread:$0]  %s3, 512, %s267, [#allocation10], 256, 256, 16
        $region24: #{tpu_custom_call.1} parent=11 // pred_fallthru
          _
        // Predicated region
        $region25: #{tpu_custom_call.1} parent=11 // pred_check
          %p273 = pneg %p132
        $region26: #{tpu_custom_call.1} parent=11 // pred_check_branch
          %275 = sbr.rel (%p273) target = $region28
        $region27: #{tpu_custom_call.1} parent=11 // pred_region
          _
        $region28: #{tpu_custom_call.1} parent=11 // pred_fallthru
          _
        // Predicated region
        $region29: #{tpu_custom_call.1} parent=11 // pred_check
          %p276 = pneg %p153
        $region30: #{tpu_custom_call.1} parent=11 // pred_check_branch
          %278 = sbr.rel (%p276) target = $region32
        $region31: #{tpu_custom_call.1} parent=11 // pred_region
          _
        $region32: #{tpu_custom_call.1} parent=11 // pred_fallthru
          _
        // Predicated region
        $region33: #{tpu_custom_call.1} parent=11 // pred_check
          %p279 = pneg %p174
        $region34: #{tpu_custom_call.1} parent=11 // pred_check_branch
          %281 = sbr.rel (%p279) target = $region36
        $region35: #{tpu_custom_call.1} parent=11 // pred_region
          _
        $region36: #{tpu_custom_call.1} parent=11 // pred_fallthru
          _
        // Predicated region
        $region37: #{tpu_custom_call.1} parent=11 // pred_check
          %p282 = pneg %p195
        $region38: #{tpu_custom_call.1} parent=11 // pred_check_branch
          %284 = sbr.rel (%p282) target = $region40
        $region39: #{tpu_custom_call.1} parent=11 // pred_region
          _
        $region40: #{tpu_custom_call.1} parent=11 // pred_fallthru
          _
      $region12: #{tpu_custom_call.1} parent=5 // pred_fallthru
        _
      %p285 = scmp.lt.s32.totalorder %s22, 2
      // Predicated region
      $region41: #{tpu_custom_call.1} parent=5 // pred_check
        %p286 = pneg %p285
      $region42: #{tpu_custom_call.1} parent=5 // pred_check_branch
        %288 = sbr.rel (%p286) target = $region44
      $region43: #{tpu_custom_call.1} parent=5 // pred_region
        // Predicated region
        $region45: #{tpu_custom_call.1} parent=43 // pred_check
          %p289 = pneg %p63
        $region46: #{tpu_custom_call.1} parent=43 // pred_check_branch
          %291 = sbr.rel (%p289) target = $region48
        $region47: #{tpu_custom_call.1} parent=43 // pred_region
          %s292 = sand.u32 %s53, 1
          %s293 = scalar_lea.sflag [#allocation5], %s292
          %s294 = sand.u32 %s53, 1
          %s295 = smul.addr %s294, 8
          %s296 = scalar_lea.vmem [#allocation8], %s295
          %s298 = ssub.s32 128, 128
          %299 = vsyncadd %s293, %s298
          %s300 = smul.addr %s22, 2
          %s301 = smul.addr %s300, 64
          %s302 = scalar_lea.hbm %s1, %s301
          %s304 = sshll.u32 %s296, 4
          %s305 = int_to_ptr.vmem [resolvable:$true] %s304
          %307 = dma.hbm_to_vmem [thread:$0]  %s302, 128, %s305, %s293
        $region48: #{tpu_custom_call.1} parent=43 // pred_fallthru
          _
      $region44: #{tpu_custom_call.1} parent=5 // pred_fallthru
        _
      %p308 = scmp.le.s32.totalorder 1, %s22
      %p309 = scmp.lt.s32.totalorder %s22, 3
      %p310 = pnand %p308, %p309
      %p311 = pneg %p310
      // Predicated region
      $region49: #{tpu_custom_call.1} parent=5 // pred_check
        _
      $region50: #{tpu_custom_call.1} parent=5 // pred_check_branch
        %313 = sbr.rel (%p310) target = $region52
      $region51: #{tpu_custom_call.1} parent=5 // pred_region
        %s314 = ssub.s32 %s22, 1
        // Predicated region
        $region53: #{tpu_custom_call.1} parent=51 // pred_check
          %p315 = pneg %p43
        $region54: #{tpu_custom_call.1} parent=51 // pred_check_branch
          %317 = sbr.rel (%p315) target = $region56
        $region55: #{tpu_custom_call.1} parent=51 // pred_region
          %318 = dma.done [#allocation7], 16
        $region56: #{tpu_custom_call.1} parent=51 // pred_fallthru
          _
        %s319 = sand.u32 %s56, 1
        %s320 = scalar_lea.sflag [#allocation5], %s319
        %s321 = sand.u32 %s56, 1
        %s322 = smul.addr %s321, 8
        %s323 = scalar_lea.vmem [#allocation8], %s322
        // Predicated region
        $region57: #{tpu_custom_call.1} parent=51 // pred_check
          %p324 = pneg %p69
        $region58: #{tpu_custom_call.1} parent=51 // pred_check_branch
          %326 = sbr.rel (%p324) target = $region60
        $region59: #{tpu_custom_call.1} parent=51 // pred_region
          %327 = dma.done %s320, 128
        $region60: #{tpu_custom_call.1} parent=51 // pred_fallthru
          _
        // Predicated region
        $region61: #{tpu_custom_call.1} parent=51 // pred_check
          %p328 = pneg %p90
        $region62: #{tpu_custom_call.1} parent=51 // pred_check_branch
          %330 = sbr.rel (%p328) target = $region64
        $region63: #{tpu_custom_call.1} parent=51 // pred_region
          %331 = dma.done [#allocation10], 512
        $region64: #{tpu_custom_call.1} parent=51 // pred_fallthru
          _
        // Predicated region
        $region65: #{tpu_custom_call.1} parent=51 // pred_check
          %p332 = pneg %p111
        $region66: #{tpu_custom_call.1} parent=51 // pred_check_branch
          %334 = sbr.rel (%p332) target = $region68
        $region67: #{tpu_custom_call.1} parent=51 // pred_region
          %335 = dma.done [#allocation10], 512
        $region68: #{tpu_custom_call.1} parent=51 // pred_fallthru
          _
        %336 = sfence
        %p337 = pneg %p43
        %p338 = pneg %p40
        %s339 = sand.u32 %s56, 1
        %s340 = scalar_lea.sflag [#allocation5], %s339
        %s341 = sand.u32 %s56, 1
        %s342 = smul.addr %s341, 8
        %s343 = scalar_lea.vmem [#allocation8], %s342
        %p344 = pneg %p69
        %p345 = pneg %p66
        %p346 = pneg %p90
        %p347 = pneg %p87
        %p348 = pneg %p111
        %p349 = pneg %p108
        %p350 = pneg %p132
        %p351 = pneg %p129
        %p352 = pneg %p153
        %p353 = pneg %p150
        %p354 = pneg %p174
        %p355 = pneg %p171
        %p356 = pneg %p195
        %p357 = pneg %p192
        %p358 = pneg %p221
        %p359 = pneg %p218
        %s360 = sand.u32 %s208, 1
        %s361 = scalar_lea.sflag [#allocation6], %s360
        %s362 = sand.u32 %s208, 1
        %s363 = smul.addr %s362, 8
        %s364 = scalar_lea.vmem [#allocation12], %s363
        %s366 = sld [smem:[#allocation4]]
        %s367 = sld [smem:[#allocation4 + $0x1]]
        %v368 = vld [vmem:[%s323] sm:$0xff]
        %vm369 = vcmp.ge.f32.partialorder %v368, 0.0
        %v370 = vstv %s366
        %v371 = vmul.f32 %v370, %v368
        %v372 = vsel %vm369, %v368, %v371
        %v374 = vcombine.high %v372, %v372
        %376 = vrot.lane.b32.xlu0 %v372, 17
        %v377 = vpop.permute.xlu0 %376
        %378 = vrot.lane.b32.xlu0 %v374, 17
        %v379 = vpop.permute.xlu0 %378
        %v380 = vlaneseq
        %v381 = vand.u32 %v380, 127
        %vm382 = vcmp.lt.s32.totalorder %v381, 17
        %v383 = vsel %vm382, %v377, %v379
        %v384 = vsel %vm382, %v379, %v377
        %v385 = vld [vmem:[#allocation9] ss:$8 sm:$0x3]
        %v387 = vlaneseq
        %v388 = vshrl.u32 %v387, 7
        %v389 = vsub.s32 0, %v388
        %v390 = vrot.slane %v385, %v389
        %v391 = vlaneseq
        %v392 = vshrl.u32 %v391, 7
        %v393 = vsub.s32 1, %v392
        %v394 = vrot.slane %v385, %v393
        %v397 = vmul.f32 %v384, %v390
        %v398 = vmul.f32 %v383, %v394
        %399 = vst [vmem:[#allocation2] sm:$0xf] %v397
        %400 = vst [vmem:[#allocation2 + $0x8] sm:$0xf] %v398
        %401 = vrot.lane.b32.xlu0 %v372, 16
        %v402 = vpop.permute.xlu0 %401
        %403 = vrot.lane.b32.xlu0 %v374, 16
        %v404 = vpop.permute.xlu0 %403
        %vm405 = vcmp.lt.s32.totalorder %v381, 16
        %v406 = vsel %vm405, %v402, %v404
        %v407 = vsel %vm405, %v404, %v402
        %s408 = scalar_lea.vmem [#allocation9], 1
        %v409 = vld [vmem:[%s408] ss:$8 sm:$0x3]
        %v411 = vlaneseq
        %v412 = vshrl.u32 %v411, 7
        %v413 = vsub.s32 0, %v412
        %v414 = vrot.slane %v409, %v413
        %v415 = vlaneseq
        %v416 = vshrl.u32 %v415, 7
        %v417 = vsub.s32 1, %v416
        %v418 = vrot.slane %v409, %v417
        %v421 = vmul.f32 %v407, %v414
        %v422 = vmul.f32 %v406, %v418
        %v425 = vrot.slane %v421, 4
        %v426 = vrot.slane %v422, 4
        %429 = vst [vmem:[#allocation2] sm:$0xf0] %v425
        %430 = vst [vmem:[#allocation2 + $0x8] sm:$0xf0] %v426
        %431 = vrot.lane.b32.xlu0 %v372, 15
        %v432 = vpop.permute.xlu0 %431
        %433 = vrot.lane.b32.xlu0 %v374, 15
        %v434 = vpop.permute.xlu0 %433
        %vm435 = vcmp.lt.s32.totalorder %v381, 15
        %v436 = vsel %vm435, %v432, %v434
        %v437 = vsel %vm435, %v434, %v432
        %s438 = scalar_lea.vmem [#allocation9], 2
        %v439 = vld [vmem:[%s438] ss:$8 sm:$0x3]
        %v441 = vlaneseq
        %v442 = vshrl.u32 %v441, 7
        %v443 = vsub.s32 0, %v442
        %v444 = vrot.slane %v439, %v443
        %v445 = vlaneseq
        %v446 = vshrl.u32 %v445, 7
        %v447 = vsub.s32 1, %v446
        %v448 = vrot.slane %v439, %v447
        %v451 = vmul.f32 %v437, %v444
        %v452 = vmul.f32 %v436, %v448
        %453 = vst [vmem:[#allocation2 + $0x10] sm:$0xf] %v451
        %454 = vst [vmem:[#allocation2 + $0x18] sm:$0xf] %v452
        %455 = vrot.lane.b32.xlu0 %v372, 1
        %v456 = vpop.permute.xlu0 %455
        %457 = vrot.lane.b32.xlu0 %v374, 1
        %v458 = vpop.permute.xlu0 %457
        %vm459 = vcmp.lt.s32.totalorder %v381, 1
        %v460 = vsel %vm459, %v456, %v458
        %v461 = vsel %vm459, %v458, %v456
        %s462 = scalar_lea.vmem [#allocation9], 3
        %v463 = vld [vmem:[%s462] ss:$8 sm:$0x3]
        %v465 = vlaneseq
        %v466 = vshrl.u32 %v465, 7
        %v467 = vsub.s32 0, %v466
        %v468 = vrot.slane %v463, %v467
        %v469 = vlaneseq
        %v470 = vshrl.u32 %v469, 7
        %v471 = vsub.s32 1, %v470
        %v472 = vrot.slane %v463, %v471
        %v475 = vmul.f32 %v461, %v468
        %v476 = vmul.f32 %v460, %v472
        %v479 = vrot.slane %v475, 4
        %v480 = vrot.slane %v476, 4
        %483 = vst [vmem:[#allocation2 + $0x10] sm:$0xf0] %v479
        %484 = vst [vmem:[#allocation2 + $0x18] sm:$0xf0] %v480
        %s485 = scalar_lea.vmem [#allocation9], 4
        %v486 = vld [vmem:[%s485] ss:$8 sm:$0x3]
        %v488 = vlaneseq
        %v489 = vshrl.u32 %v488, 7
        %v490 = vsub.s32 0, %v489
        %v491 = vrot.slane %v486, %v490
        %v492 = vlaneseq
        %v493 = vshrl.u32 %v492, 7
        %v494 = vsub.s32 1, %v493
        %v495 = vrot.slane %v486, %v494
        %v496 = vcombine.low %v491, %v495
        %v498 = vmul.f32 %v372, %v496
        %v500 = vcombine.high %v498, %v498
        %502 = vst [vmem:[#allocation2 + $0x20] sm:$0xf] %v498
        %503 = vst [vmem:[#allocation2 + $0x28] sm:$0xf] %v500
        %504 = vrot.lane.b32.xlu0 %v372, 127
        %v505 = vpop.permute.xlu0 %504
        %506 = vrot.lane.b32.xlu0 %v374, 127
        %v507 = vpop.permute.xlu0 %506
        %vm508 = vcmp.lt.s32.totalorder %v381, 127
        %v509 = vsel %vm508, %v505, %v507
        %v510 = vsel %vm508, %v507, %v505
        %s511 = scalar_lea.vmem [#allocation9], 5
        %v512 = vld [vmem:[%s511] ss:$8 sm:$0x3]
        %v514 = vlaneseq
        %v515 = vshrl.u32 %v514, 7
        %v516 = vsub.s32 0, %v515
        %v517 = vrot.slane %v512, %v516
        %v518 = vlaneseq
        %v519 = vshrl.u32 %v518, 7
        %v520 = vsub.s32 1, %v519
        %v521 = vrot.slane %v512, %v520
        %v524 = vmul.f32 %v509, %v517
        %v525 = vmul.f32 %v510, %v521
        %v528 = vrot.slane %v524, 4
        %v529 = vrot.slane %v525, 4
        %532 = vst [vmem:[#allocation2 + $0x20] sm:$0xf0] %v528
        %533 = vst [vmem:[#allocation2 + $0x28] sm:$0xf0] %v529
        %534 = vrot.lane.b32.xlu0 %v372, 113
        %v535 = vpop.permute.xlu0 %534
        %536 = vrot.lane.b32.xlu0 %v374, 113
        %v537 = vpop.permute.xlu0 %536
        %vm538 = vcmp.lt.s32.totalorder %v381, 113
        %v539 = vsel %vm538, %v535, %v537
        %v540 = vsel %vm538, %v537, %v535
        %s541 = scalar_lea.vmem [#allocation9], 6
        %v542 = vld [vmem:[%s541] ss:$8 sm:$0x3]
        %v544 = vlaneseq
        %v545 = vshrl.u32 %v544, 7
        %v546 = vsub.s32 0, %v545
        %v547 = vrot.slane %v542, %v546
        %v548 = vlaneseq
        %v549 = vshrl.u32 %v548, 7
        %v550 = vsub.s32 1, %v549
        %v551 = vrot.slane %v542, %v550
        %v554 = vmul.f32 %v539, %v547
        %v555 = vmul.f32 %v540, %v551
        %556 = vst [vmem:[#allocation2 + $0x30] sm:$0xf] %v554
        %557 = vst [vmem:[#allocation2 + $0x38] sm:$0xf] %v555
        %558 = vrot.lane.b32.xlu0 %v372, 112
        %v559 = vpop.permute.xlu0 %558
        %560 = vrot.lane.b32.xlu0 %v374, 112
        %v561 = vpop.permute.xlu0 %560
        %vm562 = vcmp.lt.s32.totalorder %v381, 112
        %v563 = vsel %vm562, %v559, %v561
        %v564 = vsel %vm562, %v561, %v559
        %s565 = scalar_lea.vmem [#allocation9], 7
        %v566 = vld [vmem:[%s565] ss:$8 sm:$0x3]
        %v568 = vlaneseq
        %v569 = vshrl.u32 %v568, 7
        %v570 = vsub.s32 0, %v569
        %v571 = vrot.slane %v566, %v570
        %v572 = vlaneseq
        %v573 = vshrl.u32 %v572, 7
        %v574 = vsub.s32 1, %v573
        %v575 = vrot.slane %v566, %v574
        %v578 = vmul.f32 %v563, %v571
        %v579 = vmul.f32 %v564, %v575
        %v582 = vrot.slane %v578, 4
        %v583 = vrot.slane %v579, 4
        %586 = vst [vmem:[#allocation2 + $0x30] sm:$0xf0] %v582
        %587 = vst [vmem:[#allocation2 + $0x38] sm:$0xf0] %v583
        %588 = vrot.lane.b32.xlu0 %v372, 111
        %v589 = vpop.permute.xlu0 %588
        %590 = vrot.lane.b32.xlu0 %v374, 111
        %v591 = vpop.permute.xlu0 %590
        %vm592 = vcmp.lt.s32.totalorder %v381, 111
        %v593 = vsel %vm592, %v589, %v591
        %v594 = vsel %vm592, %v591, %v589
        %s595 = scalar_lea.vmem [#allocation9], 16
        %v596 = vld [vmem:[%s595] ss:$8 sm:$0x3]
        %v598 = vlaneseq
        %v599 = vshrl.u32 %v598, 7
        %v600 = vsub.s32 0, %v599
        %v601 = vrot.slane %v596, %v600
        %v602 = vlaneseq
        %v603 = vshrl.u32 %v602, 7
        %v604 = vsub.s32 1, %v603
        %v605 = vrot.slane %v596, %v604
        %v608 = vmul.f32 %v593, %v601
        %v609 = vmul.f32 %v594, %v605
        %610 = vst [vmem:[#allocation2 + $0x40] sm:$0xf] %v608
        %611 = vst [vmem:[#allocation2 + $0x48] sm:$0xf] %v609
        %v612 = vld [vmem:[#allocation2] sm:$0xff]
        %v613 = vld [vmem:[#allocation2 + $0x8] sm:$0xff]
        %v614 = vld [vmem:[#allocation2 + $0x10] sm:$0xff]
        %v615 = vld [vmem:[#allocation2 + $0x18] sm:$0xff]
        %v616 = vld [vmem:[#allocation2 + $0x20] sm:$0xff]
        %v617 = vld [vmem:[#allocation2 + $0x28] sm:$0xff]
        %v618 = vld [vmem:[#allocation2 + $0x30] sm:$0xff]
        %v619 = vld [vmem:[#allocation2 + $0x38] sm:$0xff]
        %v620 = vld [vmem:[#allocation2 + $0x40] sm:$0xf]
        %v621 = vld [vmem:[#allocation2 + $0x48] sm:$0xf]
        %v622 = vpack.c.bf16 %v614, %v612
        %v623 = vpack.c.bf16 %v615, %v613
        %v624 = vpack.c.bf16 %v618, %v616
        %v625 = vpack.c.bf16 %v619, %v617
        %v626 = vpack.c.bf16 %v620, %v620
        %v627 = vpack.c.bf16 %v621, %v621
        %v628 = vld [vmem:[%s4] sm:$0x3]
        %v629 = vld [vmem:[%s5] sm:$0xf]
        %631 = vset.pattern.permute.xlu0 0
        %632 = vperm.xlu0 %631, %v629
        %v633 = vpop.permute.xlu0 %632
        %vm635 = vcmask 293888
        %v637 = vsel %vm635, %v628, 0
        %vm639 = vcmask 1041408
        %v641 = vsel %vm639, %v626, 0
        %v644 = vsel %vm639, %v627, 0
        %646 = vmatprep.subr.bf16.mxu0 0
        %647 = vmatpush1.bf16.msra.mxu0 0
        %648 = vmatprep.subr.bf16.mxu0 0
        %649 = vmatpush1.bf16.msra.mxu0 0
        %650 = vmatprep.subr.bf16.mxu0 0
        %651 = vmatpush1.bf16.msra.mxu0 0
        %652 = vmatprep.subr.bf16.mxu0 0
        %653 = vmatpush1.bf16.msra.mxu0 0
        %654 = vmatprep.subr.bf16.mxu0 0
        %655 = vmatpush1.bf16.msra.mxu0 0
        %656 = vmatprep.subr.bf16.mxu0 %v644
        %657 = vmatpush1.bf16.msra.mxu0 %v641
        %658 = vmatprep.subr.bf16.mxu0 %v625
        %659 = vmatpush1.bf16.msra.mxu0 %v624
        %660 = vmatprep.subr.bf16.mxu0 %v623
        %661 = vmatpush1.bf16.msra.mxu0 %v622
        %662 = vmatprep.subr.bf16.mxu0 0
        %663 = vmatpush2.bf16.msra.mxu0 0
        %664 = vmatprep.subr.bf16.mxu0 0
        %665 = vmatpush2.bf16.msra.mxu0 0
        %666 = vmatprep.subr.bf16.mxu0 0
        %667 = vmatpush2.bf16.msra.mxu0 0
        %668 = vmatprep.subr.bf16.mxu0 0
        %669 = vmatpush2.bf16.msra.mxu0 0
        %670 = vmatprep.subr.bf16.mxu0 0
        %671 = vmatpush2.bf16.msra.mxu0 0
        %672 = vmatprep.subr.bf16.mxu0 0
        %673 = vmatpush2.bf16.msra.mxu0 0
        %674 = vmatprep.subr.bf16.mxu0 0
        %675 = vmatpush2.bf16.msra.mxu0 0
        %676 = vmatprep.subr.bf16.mxu0 0
        %677 = vmatpush2.bf16.msra.mxu0 0
        %678 = vmatprep.mubr.bf16.mxu0 0
        %679 = vmatmul.mubr.bf16.gmra.mxu0 %v637
        %v680 = vpop.f32.mrf.mxu0
        %v681 = vadd.f32 %v633, %v680
        %v682 = vpop.f32.mrf.mxu0
        %v683 = vadd.f32 %v633, %v682
        %v684 = vpop.f32.mrf.mxu0
        %v685 = vpop.f32.mrf.mxu0
        %686 = vdwg.mxu0
        %vm687 = vcmp.ge.f32.partialorder %v681, 0.0
        %vm688 = vcmp.ge.f32.partialorder %v683, 0.0
        %v689 = vstv %s367
        %v690 = vmul.f32 %v689, %v681
        %v691 = vmul.f32 %v689, %v683
        %v692 = vsel %vm687, %v681, %v690
        %v693 = vsel %vm688, %v683, %v691
        %694 = vrot.lane.b32.xlu0 %v692, 17
        %v695 = vpop.permute.xlu0 %694
        %696 = vrot.lane.b32.xlu0 %v693, 17
        %v697 = vpop.permute.xlu0 %696
        %v698 = vsel %vm382, %v695, %v697
        %v699 = vsel %vm382, %v697, %v695
        %v700 = vld [vmem:[#allocation11] ss:$8 sm:$0x3]
        %v702 = vlaneseq
        %v703 = vshrl.u32 %v702, 7
        %v704 = vsub.s32 0, %v703
        %v705 = vrot.slane %v700, %v704
        %v706 = vlaneseq
        %v707 = vshrl.u32 %v706, 7
        %v708 = vsub.s32 1, %v707
        %v709 = vrot.slane %v700, %v708
        %v712 = vmul.f32 %v699, %v705
        %v713 = vmul.f32 %v698, %v709
        %714 = vst [vmem:[#allocation3] sm:$0xf] %v712
        %715 = vst [vmem:[#allocation3 + $0x8] sm:$0xf] %v713
        %716 = vrot.lane.b32.xlu0 %v692, 16
        %v717 = vpop.permute.xlu0 %716
        %718 = vrot.lane.b32.xlu0 %v693, 16
        %v719 = vpop.permute.xlu0 %718
        %v720 = vsel %vm405, %v717, %v719
        %v721 = vsel %vm405, %v719, %v717
        %s722 = scalar_lea.vmem [#allocation11], 1
        %v723 = vld [vmem:[%s722] ss:$8 sm:$0x3]
        %v725 = vlaneseq
        %v726 = vshrl.u32 %v725, 7
        %v727 = vsub.s32 0, %v726
        %v728 = vrot.slane %v723, %v727
        %v729 = vlaneseq
        %v730 = vshrl.u32 %v729, 7
        %v731 = vsub.s32 1, %v730
        %v732 = vrot.slane %v723, %v731
        %v735 = vmul.f32 %v721, %v728
        %v736 = vmul.f32 %v720, %v732
        %v739 = vrot.slane %v735, 4
        %v740 = vrot.slane %v736, 4
        %743 = vst [vmem:[#allocation3] sm:$0xf0] %v739
        %744 = vst [vmem:[#allocation3 + $0x8] sm:$0xf0] %v740
        %745 = vrot.lane.b32.xlu0 %v692, 15
        %v746 = vpop.permute.xlu0 %745
        %747 = vrot.lane.b32.xlu0 %v693, 15
        %v748 = vpop.permute.xlu0 %747
        %v749 = vsel %vm435, %v746, %v748
        %v750 = vsel %vm435, %v748, %v746
        %s751 = scalar_lea.vmem [#allocation11], 2
        %v752 = vld [vmem:[%s751] ss:$8 sm:$0x3]
        %v754 = vlaneseq
        %v755 = vshrl.u32 %v754, 7
        %v756 = vsub.s32 0, %v755
        %v757 = vrot.slane %v752, %v756
        %v758 = vlaneseq
        %v759 = vshrl.u32 %v758, 7
        %v760 = vsub.s32 1, %v759
        %v761 = vrot.slane %v752, %v760
        %v764 = vmul.f32 %v750, %v757
        %v765 = vmul.f32 %v749, %v761
        %766 = vst [vmem:[#allocation3 + $0x10] sm:$0xf] %v764
        %767 = vst [vmem:[#allocation3 + $0x18] sm:$0xf] %v765
        %768 = vrot.lane.b32.xlu0 %v692, 1
        %v769 = vpop.permute.xlu0 %768
        %770 = vrot.lane.b32.xlu0 %v693, 1
        %v771 = vpop.permute.xlu0 %770
        %v772 = vsel %vm459, %v769, %v771
        %v773 = vsel %vm459, %v771, %v769
        %s774 = scalar_lea.vmem [#allocation11], 3
        %v775 = vld [vmem:[%s774] ss:$8 sm:$0x3]
        %v777 = vlaneseq
        %v778 = vshrl.u32 %v777, 7
        %v779 = vsub.s32 0, %v778
        %v780 = vrot.slane %v775, %v779
        %v781 = vlaneseq
        %v782 = vshrl.u32 %v781, 7
        %v783 = vsub.s32 1, %v782
        %v784 = vrot.slane %v775, %v783
        %v787 = vmul.f32 %v773, %v780
        %v788 = vmul.f32 %v772, %v784
        %v791 = vrot.slane %v787, 4
        %v792 = vrot.slane %v788, 4
        %795 = vst [vmem:[#allocation3 + $0x10] sm:$0xf0] %v791
        %796 = vst [vmem:[#allocation3 + $0x18] sm:$0xf0] %v792
        %s797 = scalar_lea.vmem [#allocation11], 4
        %v798 = vld [vmem:[%s797] ss:$8 sm:$0x3]
        %v800 = vlaneseq
        %v801 = vshrl.u32 %v800, 7
        %v802 = vsub.s32 0, %v801
        %v803 = vrot.slane %v798, %v802
        %v804 = vlaneseq
        %v805 = vshrl.u32 %v804, 7
        %v806 = vsub.s32 1, %v805
        %v807 = vrot.slane %v798, %v806
        %v810 = vmul.f32 %v692, %v803
        %v811 = vmul.f32 %v693, %v807
        %812 = vst [vmem:[#allocation3 + $0x20] sm:$0xf] %v810
        %813 = vst [vmem:[#allocation3 + $0x28] sm:$0xf] %v811
        %814 = vrot.lane.b32.xlu0 %v692, 127
        %v815 = vpop.permute.xlu0 %814
        %816 = vrot.lane.b32.xlu0 %v693, 127
        %v817 = vpop.permute.xlu0 %816
        %v818 = vsel %vm508, %v815, %v817
        %v819 = vsel %vm508, %v817, %v815
        %s820 = scalar_lea.vmem [#allocation11], 5
        %v821 = vld [vmem:[%s820] ss:$8 sm:$0x3]
        %v823 = vlaneseq
        %v824 = vshrl.u32 %v823, 7
        %v825 = vsub.s32 0, %v824
        %v826 = vrot.slane %v821, %v825
        %v827 = vlaneseq
        %v828 = vshrl.u32 %v827, 7
        %v829 = vsub.s32 1, %v828
        %v830 = vrot.slane %v821, %v829
        %v833 = vmul.f32 %v818, %v826
        %v834 = vmul.f32 %v819, %v830
        %v837 = vrot.slane %v833, 4
        %v838 = vrot.slane %v834, 4
        %841 = vst [vmem:[#allocation3 + $0x20] sm:$0xf0] %v837
        %842 = vst [vmem:[#allocation3 + $0x28] sm:$0xf0] %v838
        %843 = vrot.lane.b32.xlu0 %v692, 113
        %v844 = vpop.permute.xlu0 %843
        %845 = vrot.lane.b32.xlu0 %v693, 113
        %v846 = vpop.permute.xlu0 %845
        %v847 = vsel %vm538, %v844, %v846
        %v848 = vsel %vm538, %v846, %v844
        %s849 = scalar_lea.vmem [#allocation11], 6
        %v850 = vld [vmem:[%s849] ss:$8 sm:$0x3]
        %v852 = vlaneseq
        %v853 = vshrl.u32 %v852, 7
        %v854 = vsub.s32 0, %v853
        %v855 = vrot.slane %v850, %v854
        %v856 = vlaneseq
        %v857 = vshrl.u32 %v856, 7
        %v858 = vsub.s32 1, %v857
        %v859 = vrot.slane %v850, %v858
        %v862 = vmul.f32 %v847, %v855
        %v863 = vmul.f32 %v848, %v859
        %864 = vst [vmem:[#allocation3 + $0x30] sm:$0xf] %v862
        %865 = vst [vmem:[#allocation3 + $0x38] sm:$0xf] %v863
        %866 = vrot.lane.b32.xlu0 %v692, 112
        %v867 = vpop.permute.xlu0 %866
        %868 = vrot.lane.b32.xlu0 %v693, 112
        %v869 = vpop.permute.xlu0 %868
        %v870 = vsel %vm562, %v867, %v869
        %v871 = vsel %vm562, %v869, %v867
        %s872 = scalar_lea.vmem [#allocation11], 7
        %v873 = vld [vmem:[%s872] ss:$8 sm:$0x3]
        %v875 = vlaneseq
        %v876 = vshrl.u32 %v875, 7
        %v877 = vsub.s32 0, %v876
        %v878 = vrot.slane %v873, %v877
        %v879 = vlaneseq
        %v880 = vshrl.u32 %v879, 7
        %v881 = vsub.s32 1, %v880
        %v882 = vrot.slane %v873, %v881
        %v885 = vmul.f32 %v870, %v878
        %v886 = vmul.f32 %v871, %v882
        %v889 = vrot.slane %v885, 4
        %v890 = vrot.slane %v886, 4
        %893 = vst [vmem:[#allocation3 + $0x30] sm:$0xf0] %v889
        %894 = vst [vmem:[#allocation3 + $0x38] sm:$0xf0] %v890
        %895 = vrot.lane.b32.xlu0 %v692, 111
        %v896 = vpop.permute.xlu0 %895
        %897 = vrot.lane.b32.xlu0 %v693, 111
        %v898 = vpop.permute.xlu0 %897
        %v899 = vsel %vm592, %v896, %v898
        %v900 = vsel %vm592, %v898, %v896
        %s901 = scalar_lea.vmem [#allocation11], 16
        %v902 = vld [vmem:[%s901] ss:$8 sm:$0x3]
        %v904 = vlaneseq
        %v905 = vshrl.u32 %v904, 7
        %v906 = vsub.s32 0, %v905
        %v907 = vrot.slane %v902, %v906
        %v908 = vlaneseq
        %v909 = vshrl.u32 %v908, 7
        %v910 = vsub.s32 1, %v909
        %v911 = vrot.slane %v902, %v910
        %v914 = vmul.f32 %v899, %v907
        %v915 = vmul.f32 %v900, %v911
        %916 = vst [vmem:[#allocation3 + $0x40] sm:$0xf] %v914
        %917 = vst [vmem:[#allocation3 + $0x48] sm:$0xf] %v915
        %v918 = vld [vmem:[#allocation3] sm:$0xff]
        %v919 = vld [vmem:[#allocation3 + $0x8] sm:$0xff]
        %v920 = vld [vmem:[#allocation3 + $0x10] sm:$0xff]
        %v921 = vld [vmem:[#allocation3 + $0x18] sm:$0xff]
        %v922 = vld [vmem:[#allocation3 + $0x20] sm:$0xff]
        %v923 = vld [vmem:[#allocation3 + $0x28] sm:$0xff]
        %v924 = vld [vmem:[#allocation3 + $0x30] sm:$0xff]
        %v925 = vld [vmem:[#allocation3 + $0x38] sm:$0xff]
        %v926 = vld [vmem:[#allocation3 + $0x40] sm:$0xf]
        %v927 = vld [vmem:[#allocation3 + $0x48] sm:$0xf]
        %v928 = vpack.c.bf16 %v920, %v918
        %v929 = vpack.c.bf16 %v921, %v919
        %v930 = vpack.c.bf16 %v924, %v922
        %v931 = vpack.c.bf16 %v925, %v923
        %v932 = vpack.c.bf16 %v926, %v926
        %v933 = vpack.c.bf16 %v927, %v927
        %v934 = vld [vmem:[%s6] sm:$0x3]
        %v935 = vld [vmem:[%s7] sm:$0xf]
        %937 = vset.pattern.permute.xlu0 0
        %938 = vperm.xlu0 %937, %v935
        %v939 = vpop.permute.xlu0 %938
        %v942 = vsel %vm635, %v934, 0
        %v945 = vsel %vm639, %v932, 0
        %v948 = vsel %vm639, %v933, 0
        %950 = vmatprep.subr.bf16.mxu0 0
        %951 = vmatpush1.bf16.msra.mxu0 0
        %952 = vmatprep.subr.bf16.mxu0 0
        %953 = vmatpush1.bf16.msra.mxu0 0
        %954 = vmatprep.subr.bf16.mxu0 0
        %955 = vmatpush1.bf16.msra.mxu0 0
        %956 = vmatprep.subr.bf16.mxu0 0
        %957 = vmatpush1.bf16.msra.mxu0 0
        %958 = vmatprep.subr.bf16.mxu0 0
        %959 = vmatpush1.bf16.msra.mxu0 0
        %960 = vmatprep.subr.bf16.mxu0 %v948
        %961 = vmatpush1.bf16.msra.mxu0 %v945
        %962 = vmatprep.subr.bf16.mxu0 %v931
        %963 = vmatpush1.bf16.msra.mxu0 %v930
        %964 = vmatprep.subr.bf16.mxu0 %v929
        %965 = vmatpush1.bf16.msra.mxu0 %v928
        %966 = vmatprep.subr.bf16.mxu0 0
        %967 = vmatpush2.bf16.msra.mxu0 0
        %968 = vmatprep.subr.bf16.mxu0 0
        %969 = vmatpush2.bf16.msra.mxu0 0
        %970 = vmatprep.subr.bf16.mxu0 0
        %971 = vmatpush2.bf16.msra.mxu0 0
        %972 = vmatprep.subr.bf16.mxu0 0
        %973 = vmatpush2.bf16.msra.mxu0 0
        %974 = vmatprep.subr.bf16.mxu0 0
        %975 = vmatpush2.bf16.msra.mxu0 0
        %976 = vmatprep.subr.bf16.mxu0 0
        %977 = vmatpush2.bf16.msra.mxu0 0
        %978 = vmatprep.subr.bf16.mxu0 0
        %979 = vmatpush2.bf16.msra.mxu0 0
        %980 = vmatprep.subr.bf16.mxu0 0
        %981 = vmatpush2.bf16.msra.mxu0 0
        %982 = vmatprep.mubr.bf16.mxu0 0
        %983 = vmatmul.mubr.bf16.gmra.mxu0 %v942
        %v984 = vpop.f32.mrf.mxu0
        %v985 = vadd.f32 %v939, %v984
        %v986 = vpop.f32.mrf.mxu0
        %v987 = vadd.f32 %v939, %v986
        %v988 = vpop.f32.mrf.mxu0
        %v989 = vpop.f32.mrf.mxu0
        %990 = vdwg.mxu0
        %v993 = vcombine.low %v985, %v987
        %995 = vst [vmem:[%s364] sm:$0xff] %v993
        %s996 = sand.u32 %s208, 1
        %s997 = scalar_lea.sflag [#allocation6], %s996
        %s998 = sand.u32 %s208, 1
        %s999 = smul.addr %s998, 8
        %s1000 = scalar_lea.vmem [#allocation12], %s999
        // Predicated region
        $region69: #{tpu_custom_call.1} parent=51 // pred_check
          %p1001 = pneg %p218
        $region70: #{tpu_custom_call.1} parent=51 // pred_check_branch
          %1003 = sbr.rel (%p1001) target = $region72
        $region71: #{tpu_custom_call.1} parent=51 // pred_region
          %s1005 = ssub.s32 128, 128
          %1006 = vsyncadd %s997, %s1005
          %s1007 = smul.addr %s27, 2
          %s1008 = smul.addr %s1007, 64
          %s1009 = scalar_lea.hbm %s8, %s1008
          %s1011 = sshll.u32 %s1000, 4
          %s1012 = int_to_ptr.vmem [resolvable:$true] %s1011
          %1014 = dma.vmem_to_hbm [thread:$0]  %s1012, 128, %s1009, %s997
        $region72: #{tpu_custom_call.1} parent=51 // pred_fallthru
          _
      $region52: #{tpu_custom_call.1} parent=5 // pred_fallthru
        _
      %p1015 = scmp.le.s32.totalorder 2, %s22
      // Predicated region
      $region73: #{tpu_custom_call.1} parent=5 // pred_check
        %p1016 = pneg %p1015
      $region74: #{tpu_custom_call.1} parent=5 // pred_check_branch
        %1018 = sbr.rel (%p1016) target = $region76
      $region75: #{tpu_custom_call.1} parent=5 // pred_region
        %s1019 = ssub.s32 %s22, 2
        // Predicated region
        $region77: #{tpu_custom_call.1} parent=75 // pred_check
          %p1020 = pneg %p224
        $region78: #{tpu_custom_call.1} parent=75 // pred_check_branch
          %1022 = sbr.rel (%p1020) target = $region80
        $region79: #{tpu_custom_call.1} parent=75 // pred_region
          %s1023 = sand.u32 %s209, 1
          %s1024 = scalar_lea.sflag [#allocation6], %s1023
          %s1025 = sand.u32 %s209, 1
          %s1026 = smul.addr %s1025, 8
          %s1027 = scalar_lea.vmem [#allocation12], %s1026
          %1028 = dma.done %s1024, 128
        $region80: #{tpu_custom_call.1} parent=75 // pred_fallthru
          _
      $region76: #{tpu_custom_call.1} parent=5 // pred_fallthru
        _
    $region6: #{tpu_custom_call.1} parent=1 // loop_footer
      %s26 = sadd.s32 1, %s22
    $region7: #{tpu_custom_call.1} parent=1 // loop_footer_branch
      %21 = sbr.rel target = $region3
    $region8: #{tpu_custom_call.1} parent=1 // loop_exit
      _
    %1029 = vsyncpa [#allocation5], 1
    %s1030 = scalar_lea.sflag [#allocation5], 1
    %1031 = vsyncpa %s1030, 1
    %1032 = vsyncpa [#allocation10], 1
    %1033 = vsyncpa [#allocation6], 1
    %s1034 = scalar_lea.sflag [#allocation6], 1
    %1035 = vsyncpa %s1034, 1
    %1036 = vsyncpa [#allocation7], 1
    %s1037 = scalar_lea.sflag [#allocation7], 1
    %1038 = vsyncpa %s1037, 1

</llo_original>
